<compile_context>
chip_gen: v5e
topology: v5e:2x2
jax: 0.10.0
libtpu: 0.0.40
codegen_flags: <defaults>
</compile_context>

<pallas_src>
import functools

import jax
import jax.numpy as jnp
from jax.experimental import pallas as pl
from jax.experimental.pallas import tpu as pltpu

EPS = 1e-5
CLIP_MAX = 20.0  # Hardtanh(0, 20)


# --------------------------------------------------------------------------- #
# Fused kernel: one ResBlock per grid step; activation resident in out_ref.
# --------------------------------------------------------------------------- #
def _resnet_kernel(x_ref, sh_ref, proj_ref, w1_ref, w2_ref, bn_ref, out_ref,
                   *, count):
    blk = pl.program_id(0)

    # Block 0: seed the VMEM-resident activation with the network input.
    @pl.when(blk == 0)
    def _():
        out_ref[...] = x_ref[...]

    a = out_ref[...].astype(jnp.float32)     # (NH, WC) activation entering block
    sh = sh_ref[...]                         # (2, NH, NH) row-shift matrices
    proj = proj_ref[...]                     # (WC, WC) channel projector
    bn = bn_ref[...][0]                      # (4, WC): g1, b1, g2, b2 (lane-tiled)
    g1, b1, g2, b2 = bn[0:1], bn[1:2], bn[2:3], bn[3:4]
    inv_cnt = 1.0 / count

    def conv3x3(x, w_ref):
        # Vertical taps via 0/1 shift matrices (zero padding & image boundaries
        # baked in); horizontal taps + zero padding baked into the banded
        # weight matrices w_ref[0, kh] of shape (W*Cin, W*Cout).
        up = jnp.dot(sh[0], x, preferred_element_type=jnp.float32)
        dn = jnp.dot(sh[1], x, preferred_element_type=jnp.float32)
        o = jnp.dot(up, w_ref[0, 0], preferred_element_type=jnp.float32)
        o = o + jnp.dot(x, w_ref[0, 1], preferred_element_type=jnp.float32)
        o = o + jnp.dot(dn, w_ref[0, 2], preferred_element_type=jnp.float32)
        return o

    def batchnorm(y, g, b):
        # Training-mode BN: per-channel batch mean / biased variance over
        # (N, H, W).  `proj` replicates per-channel sums back onto lanes.
        mean = jnp.dot(jnp.sum(y, axis=0, keepdims=True), proj,
                       preferred_element_type=jnp.float32) * inv_cnt
        yc = y - mean
        var = jnp.dot(jnp.sum(yc * yc, axis=0, keepdims=True), proj,
                      preferred_element_type=jnp.float32) * inv_cnt
        return yc * (jax.lax.rsqrt(var + EPS) * g) + b

    h = jnp.clip(batchnorm(conv3x3(a, w1_ref), g1, b1), 0.0, CLIP_MAX)
    o = batchnorm(conv3x3(h, w2_ref), g2, b2) + a          # residual add
    out_ref[...] = jnp.clip(o, 0.0, CLIP_MAX).astype(out_ref.dtype)


# --------------------------------------------------------------------------- #
# Wrapper-side parameter packing
# --------------------------------------------------------------------------- #
def _banded_weights(w_hwio, W):
    """(3,3,Cin,Cout) HWIO conv weights -> (3, W*Cin, W*Cout) banded matrices."""
    KH, KW, Cin, Cout = w_hwio.shape
    kw = jnp.arange(KW)[:, None, None]
    w_in = jnp.arange(W)[None, :, None]
    w_out = jnp.arange(W)[None, None, :]
    sel = (w_in == w_out + kw - (KW // 2)).astype(w_hwio.dtype)   # (KW, W, W)
    band = jnp.einsum('hkio,kab->haibo', w_hwio, sel)
    return band.reshape(KH, W * Cin, W * Cout)


def resnet_forward(x_nchw, blocks_params):
    """ResNet.forward: `number` ResBlocks fused into one pallas_call."""
    N, C, H, W = x_nchw.shape
    number = len(blocks_params)
    if number == 0:
        return x_nchw
    NH, WC = N * H, W * C

    # Lane-dense activation layout: rows = N*H image rows, lanes = W*C.
    x_rows = jnp.transpose(x_nchw, (0, 2, 3, 1)).reshape(NH, WC)

    # Row-shift matrices (vertical conv taps + zero padding at image edges).
    r = jnp.arange(NH)
    sh_up = (r[:, None] - 1 == r[None, :]) & (r[:, None] % H != 0)
    sh_dn = (r[:, None] + 1 == r[None, :]) & (r[:, None] % H != H - 1)
    shifts = jnp.stack([sh_up, sh_dn]).astype(jnp.float32)        # (2, NH, NH)

    # Channel projector: replicate per-channel sums across lanes (i%C == j%C).
    lane = jnp.arange(WC)
    proj = (lane[:, None] % C == lane[None, :] % C).astype(jnp.float32)

    wm1, wm2, bnp = [], [], []
    for (w1, g1, b1, w2, g2, b2) in blocks_params:
        assert w1.shape[2] == w1.shape[3] == C, \
            "residual path requires inplanes == planes"
        wm1.append(_banded_weights(w1, W))
        wm2.append(_banded_weights(w2, W))
        bnp.append(jnp.stack([jnp.tile(g1, W), jnp.tile(b1, W),
                              jnp.tile(g2, W), jnp.tile(b2, W)]))
    wm1 = jnp.stack(wm1)          # (number, 3, WC, WC)
    wm2 = jnp.stack(wm2)          # (number, 3, WC, WC)
    bnp = jnp.stack(bnp)          # (number, 4, WC)

    kernel = functools.partial(_resnet_kernel, count=N * H * W)
    out_rows = pl.pallas_call(
        kernel,
        out_shape=jax.ShapeDtypeStruct((NH, WC), x_rows.dtype),
        grid_spec=pltpu.PrefetchScalarGridSpec(
            num_scalar_prefetch=0,
            grid=(number,),
            in_specs=[
                pl.BlockSpec((NH, WC), lambda b: (0, 0)),             # x (resident)
                pl.BlockSpec((2, NH, NH), lambda b: (0, 0, 0)),       # shifts
                pl.BlockSpec((WC, WC), lambda b: (0, 0)),             # projector
                pl.BlockSpec((1, 3, WC, WC), lambda b: (b, 0, 0, 0)), # conv1 weights
                pl.BlockSpec((1, 3, WC, WC), lambda b: (b, 0, 0, 0)), # conv2 weights
                pl.BlockSpec((1, 4, WC), lambda b: (b, 0, 0)),        # bn params
            ],
            out_specs=pl.BlockSpec((NH, WC), lambda b: (0, 0)),       # resident act
        ),
        compiler_params=pltpu.CompilerParams(
            dimension_semantics=("arbitrary",),   # blocks are sequential
        ),
    )(x_rows, shifts, proj, wm1, wm2, bnp)

    return jnp.transpose(out_rows.reshape(N, H, W, C), (0, 3, 1, 2))


# -------------------- parameter init (mimics PyTorch defaults) ---------------
def init_resblock_params(key, inplanes, planes):
    k1, k2 = jax.random.split(key)
    bound1 = 1.0 / jnp.sqrt(inplanes * 9.0)
    bound2 = 1.0 / jnp.sqrt(planes * 9.0)
    w1_oihw = jax.random.uniform(k1, (planes, inplanes, 3, 3), jnp.float32,
                                 -bound1, bound1)
    w2_oihw = jax.random.uniform(k2, (planes, planes, 3, 3), jnp.float32,
                                 -bound2, bound2)
    w1 = jnp.transpose(w1_oihw, (2, 3, 1, 0))   # HWIO
    w2 = jnp.transpose(w2_oihw, (2, 3, 1, 0))
    g1 = jnp.ones((planes,), jnp.float32)
    b1 = jnp.zeros((planes,), jnp.float32)
    g2 = jnp.ones((planes,), jnp.float32)
    b2 = jnp.zeros((planes,), jnp.float32)
    return (w1, g1, b1, w2, g2, b2), (w1_oihw, w2_oihw)


# -------------------- pure-JAX reference (correctness check) -----------------
def _ref_resblock(x_nchw, w1_oihw, w2_oihw):
    def conv(x, w):
        return jax.lax.conv_general_dilated(
            x, w, window_strides=(1, 1), padding=((1, 1), (1, 1)),
            dimension_numbers=('NCHW', 'OIHW', 'NCHW'))

    def bn(y):
        mean = jnp.mean(y, axis=(0, 2, 3), keepdims=True)
        var = jnp.mean((y - mean) ** 2, axis=(0, 2, 3), keepdims=True)
        return (y - mean) * jax.lax.rsqrt(var + EPS)

    out = jnp.clip(bn(conv(x_nchw, w1_oihw)), 0.0, CLIP_MAX)
    out = bn(conv(out, w2_oihw)) + x_nchw
    return jnp.clip(out, 0.0, CLIP_MAX)


if __name__ == "__main__":
    # ResNet(inplanes=4, planes=4, number=2); input (N=2, C=4, H=16, W=16), NCHW.
    inplanes = planes = 4
    number = 2
    N, H, W = 2, 16, 16

    root = jax.random.PRNGKey(0)
    kx, kp = jax.random.split(root)
    x_nchw = jax.random.normal(kx, (N, inplanes, H, W), jnp.float32)

    block_keys = jax.random.split(kp, number)
    blocks_params, blocks_ref_w = [], []
    for i in range(number):
        p, rw = init_resblock_params(block_keys[i], inplanes, planes)
        blocks_params.append(p)
        blocks_ref_w.append(rw)

    fwd = jax.jit(resnet_forward)
    out = jax.block_until_ready(fwd(x_nchw, blocks_params))

    # sanity check vs. pure-JAX reference
    ref = x_nchw
    for (w1_oihw, w2_oihw) in blocks_ref_w:
        ref = _ref_resblock(ref, w1_oihw, w2_oihw)
    assert out.shape == (N, planes, H, W)
    assert jnp.allclose(out, ref, atol=2e-3, rtol=2e-3), (
        float(jnp.max(jnp.abs(out - ref))))

    print("KERNEL_OK")
</pallas_src>

<mosaic_0001>
module attributes {stable_mosaic.version = 11 : i64} {
  func.func @_resnet_kernel(%arg0: i32, %arg1: memref<32x64xf32, #tpu.memory_space<vmem>>, %arg2: memref<2x32x32xf32, #tpu.memory_space<vmem>>, %arg3: memref<64x64xf32, #tpu.memory_space<vmem>>, %arg4: memref<1x3x64x64xf32, #tpu.memory_space<vmem>>, %arg5: memref<1x3x64x64xf32, #tpu.memory_space<vmem>>, %arg6: memref<1x4x64xf32, #tpu.memory_space<vmem>>, %arg7: memref<32x64xf32, #tpu.memory_space<vmem>>) attributes {dimension_semantics = [#tpu.dimension_semantics<arbitrary>], iteration_bounds = array<i64: 2>, scalar_prefetch = 0 : i64, scratch_operands = 0 : i64, tpu.core_type = #tpu.core_type<tc>, window_params = [{pipeline_mode = #tpu.pipeline_mode<synchronous>, transform_indices = @transform_0, window_bounds = array<i64: 32, 64>}, {pipeline_mode = #tpu.pipeline_mode<synchronous>, transform_indices = @transform_1, window_bounds = array<i64: 2, 32, 32>}, {pipeline_mode = #tpu.pipeline_mode<synchronous>, transform_indices = @transform_2, window_bounds = array<i64: 64, 64>}, {transform_indices = @transform_3, window_bounds = array<i64: 1, 3, 64, 64>}, {transform_indices = @transform_4, window_bounds = array<i64: 1, 3, 64, 64>}, {transform_indices = @transform_5, window_bounds = array<i64: 1, 4, 64>}, {pipeline_mode = #tpu.pipeline_mode<synchronous>, transform_indices = @transform_6, window_bounds = array<i64: 32, 64>}]} {
    %c0_i32 = arith.constant 0 : i32
    %0 = arith.cmpi eq, %arg0, %c0_i32 : i32
    %1 = arith.extui %0 : i1 to i32
    %c0_i32_0 = arith.constant 0 : i32
    %2 = arith.cmpi ne, %1, %c0_i32_0 : i32
    scf.if %2 {
      %c0_61 = arith.constant 0 : index
      %c0_62 = arith.constant 0 : index
      %98 = vector.load %arg1[%c0_61, %c0_62] : memref<32x64xf32, #tpu.memory_space<vmem>>, vector<32x64xf32>
      %c0_63 = arith.constant 0 : index
      %c0_64 = arith.constant 0 : index
      %99 = vector.load %arg7[%c0_63, %c0_64] : memref<32x64xf32, #tpu.memory_space<vmem>>, vector<32x64xf32>
      tpu.vector_store %arg7[%c0_63, %c0_64], %98 {strides = array<i32>} : memref<32x64xf32, #tpu.memory_space<vmem>>, vector<32x64xf32>,
    } else {
    }
    %c0 = arith.constant 0 : index
    %c0_1 = arith.constant 0 : index
    %3 = vector.load %arg7[%c0, %c0_1] : memref<32x64xf32, #tpu.memory_space<vmem>>, vector<32x64xf32>
    %c0_2 = arith.constant 0 : index
    %c0_3 = arith.constant 0 : index
    %c0_4 = arith.constant 0 : index
    %4 = vector.load %arg2[%c0_2, %c0_3, %c0_4] : memref<2x32x32xf32, #tpu.memory_space<vmem>>, vector<2x32x32xf32>
    %c0_5 = arith.constant 0 : index
    %c0_6 = arith.constant 0 : index
    %5 = vector.load %arg3[%c0_5, %c0_6] : memref<64x64xf32, #tpu.memory_space<vmem>>, vector<64x64xf32>
    %c0_7 = arith.constant 0 : index
    %c0_8 = arith.constant 0 : index
    %c0_9 = arith.constant 0 : index
    %6 = vector.load %arg6[%c0_7, %c0_8, %c0_9] : memref<1x4x64xf32, #tpu.memory_space<vmem>>, vector<1x4x64xf32>
    %7 = vector.shape_cast %6 : vector<1x4x64xf32> to vector<4x64xf32>
    %8 = vector.extract_strided_slice %7 {offsets = [0, 0], sizes = [1, 64], strides = [1, 1]} : vector<4x64xf32> to vector<1x64xf32>
    %9 = vector.extract_strided_slice %7 {offsets = [1, 0], sizes = [1, 64], strides = [1, 1]} : vector<4x64xf32> to vector<1x64xf32>
    %10 = vector.extract_strided_slice %7 {offsets = [2, 0], sizes = [1, 64], strides = [1, 1]} : vector<4x64xf32> to vector<1x64xf32>
    %11 = vector.extract_strided_slice %7 {offsets = [3, 0], sizes = [1, 64], strides = [1, 1]} : vector<4x64xf32> to vector<1x64xf32>
    %12 = vector.extract_strided_slice %4 {offsets = [0, 0, 0], sizes = [1, 32, 32], strides = [1, 1, 1]} : vector<2x32x32xf32> to vector<1x32x32xf32>
    %13 = vector.shape_cast %12 : vector<1x32x32xf32> to vector<32x32xf32>
    %cst = arith.constant dense<0.000000e+00> : vector<32x64xf32>
    %14 = tpu.matmul %13, %3, %cst {dimension_numbers = #tpu.dot_dimension_numbers<[1], [0], [0], [1], [0, 0, 1, 1], [], []>} : vector<32x32xf32>, vector<32x64xf32>, vector<32x64xf32> -> vector<32x64xf32>
    %15 = vector.extract_strided_slice %4 {offsets = [1, 0, 0], sizes = [1, 32, 32], strides = [1, 1, 1]} : vector<2x32x32xf32> to vector<1x32x32xf32>
    %16 = vector.shape_cast %15 : vector<1x32x32xf32> to vector<32x32xf32>
    %cst_10 = arith.constant dense<0.000000e+00> : vector<32x64xf32>
    %17 = tpu.matmul %16, %3, %cst_10 {dimension_numbers = #tpu.dot_dimension_numbers<[1], [0], [0], [1], [0, 0, 1, 1], [], []>} : vector<32x32xf32>, vector<32x64xf32>, vector<32x64xf32> -> vector<32x64xf32>
    %c0_11 = arith.constant 0 : index
    %c0_12 = arith.constant 0 : index
    %c0_13 = arith.constant 0 : index
    %c0_14 = arith.constant 0 : index
    %18 = vector.load %arg4[%c0_11, %c0_12, %c0_13, %c0_14] : memref<1x3x64x64xf32, #tpu.memory_space<vmem>>, vector<1x1x64x64xf32>
    %19 = vector.shape_cast %18 : vector<1x1x64x64xf32> to vector<64x64xf32>
    %cst_15 = arith.constant dense<0.000000e+00> : vector<32x64xf32>
    %20 = tpu.matmul %14, %19, %cst_15 {dimension_numbers = #tpu.dot_dimension_numbers<[1], [0], [0], [1], [0, 0, 1, 1], [], []>} : vector<32x64xf32>, vector<64x64xf32>, vector<32x64xf32> -> vector<32x64xf32>
    %c0_16 = arith.constant 0 : index
    %c1 = arith.constant 1 : index
    %c0_17 = arith.constant 0 : index
    %c0_18 = arith.constant 0 : index
    %21 = vector.load %arg4[%c0_16, %c1, %c0_17, %c0_18] : memref<1x3x64x64xf32, #tpu.memory_space<vmem>>, vector<1x1x64x64xf32>
    %22 = vector.shape_cast %21 : vector<1x1x64x64xf32> to vector<64x64xf32>
    %cst_19 = arith.constant dense<0.000000e+00> : vector<32x64xf32>
    %23 = tpu.matmul %3, %22, %cst_19 {dimension_numbers = #tpu.dot_dimension_numbers<[1], [0], [0], [1], [0, 0, 1, 1], [], []>} : vector<32x64xf32>, vector<64x64xf32>, vector<32x64xf32> -> vector<32x64xf32>
    %24 = arith.addf %20, %23 : vector<32x64xf32>
    %c0_20 = arith.constant 0 : index
    %c2 = arith.constant 2 : index
    %c0_21 = arith.constant 0 : index
    %c0_22 = arith.constant 0 : index
    %25 = vector.load %arg4[%c0_20, %c2, %c0_21, %c0_22] : memref<1x3x64x64xf32, #tpu.memory_space<vmem>>, vector<1x1x64x64xf32>
    %26 = vector.shape_cast %25 : vector<1x1x64x64xf32> to vector<64x64xf32>
    %cst_23 = arith.constant dense<0.000000e+00> : vector<32x64xf32>
    %27 = tpu.matmul %17, %26, %cst_23 {dimension_numbers = #tpu.dot_dimension_numbers<[1], [0], [0], [1], [0, 0, 1, 1], [], []>} : vector<32x64xf32>, vector<64x64xf32>, vector<32x64xf32> -> vector<32x64xf32>
    %28 = arith.addf %24, %27 : vector<32x64xf32>
    %cst_24 = arith.constant dense<0.000000e+00> : vector<64xf32>
    %29 = vector.multi_reduction <add>, %28, %cst_24 [0] : vector<32x64xf32> to vector<64xf32>
    %30 = vector.shape_cast %29 : vector<64xf32> to vector<1x64xf32>
    %cst_25 = arith.constant dense<0.000000e+00> : vector<1x64xf32>
    %31 = tpu.matmul %30, %5, %cst_25 {dimension_numbers = #tpu.dot_dimension_numbers<[1], [0], [0], [1], [0, 0, 1, 1], [], []>} : vector<1x64xf32>, vector<64x64xf32>, vector<1x64xf32> -> vector<1x64xf32>
    %cst_26 = arith.constant 0.001953125 : f32
    %32 = vector.broadcast %cst_26 : f32 to vector<1x64xf32>
    %33 = arith.mulf %31, %32 : vector<1x64xf32>
    %34 = vector.broadcast %33 : vector<1x64xf32> to vector<32x64xf32>
    %35 = arith.subf %28, %34 : vector<32x64xf32>
    %36 = arith.mulf %35, %35 : vector<32x64xf32>
    %cst_27 = arith.constant dense<0.000000e+00> : vector<64xf32>
    %37 = vector.multi_reduction <add>, %36, %cst_27 [0] : vector<32x64xf32> to vector<64xf32>
    %38 = vector.shape_cast %37 : vector<64xf32> to vector<1x64xf32>
    %cst_28 = arith.constant dense<0.000000e+00> : vector<1x64xf32>
    %39 = tpu.matmul %38, %5, %cst_28 {dimension_numbers = #tpu.dot_dimension_numbers<[1], [0], [0], [1], [0, 0, 1, 1], [], []>} : vector<1x64xf32>, vector<64x64xf32>, vector<1x64xf32> -> vector<1x64xf32>
    %cst_29 = arith.constant 0.001953125 : f32
    %40 = vector.broadcast %cst_29 : f32 to vector<1x64xf32>
    %41 = arith.mulf %39, %40 : vector<1x64xf32>
    %cst_30 = arith.constant 9.99999974E-6 : f32
    %42 = vector.broadcast %cst_30 : f32 to vector<1x64xf32>
    %43 = arith.addf %41, %42 : vector<1x64xf32>
    %44 = math.rsqrt %43 : vector<1x64xf32>
    %45 = arith.mulf %44, %8 : vector<1x64xf32>
    %46 = vector.broadcast %45 : vector<1x64xf32> to vector<32x64xf32>
    %47 = arith.mulf %35, %46 : vector<32x64xf32>
    %48 = vector.broadcast %9 : vector<1x64xf32> to vector<32x64xf32>
    %49 = arith.addf %47, %48 : vector<32x64xf32>
    %cst_31 = arith.constant 0.000000e+00 : f32
    %cst_32 = arith.constant 2.000000e+01 : f32
    %50 = vector.broadcast %cst_31 : f32 to vector<32x64xf32>
    %51 = arith.maximumf %50, %49 : vector<32x64xf32>
    %52 = vector.broadcast %cst_32 : f32 to vector<32x64xf32>
    %53 = arith.minimumf %52, %51 : vector<32x64xf32>
    %54 = vector.extract_strided_slice %4 {offsets = [0, 0, 0], sizes = [1, 32, 32], strides = [1, 1, 1]} : vector<2x32x32xf32> to vector<1x32x32xf32>
    %55 = vector.shape_cast %54 : vector<1x32x32xf32> to vector<32x32xf32>
    %cst_33 = arith.constant dense<0.000000e+00> : vector<32x64xf32>
    %56 = tpu.matmul %55, %53, %cst_33 {dimension_numbers = #tpu.dot_dimension_numbers<[1], [0], [0], [1], [0, 0, 1, 1], [], []>} : vector<32x32xf32>, vector<32x64xf32>, vector<32x64xf32> -> vector<32x64xf32>
    %57 = vector.extract_strided_slice %4 {offsets = [1, 0, 0], sizes = [1, 32, 32], strides = [1, 1, 1]} : vector<2x32x32xf32> to vector<1x32x32xf32>
    %58 = vector.shape_cast %57 : vector<1x32x32xf32> to vector<32x32xf32>
    %cst_34 = arith.constant dense<0.000000e+00> : vector<32x64xf32>
    %59 = tpu.matmul %58, %53, %cst_34 {dimension_numbers = #tpu.dot_dimension_numbers<[1], [0], [0], [1], [0, 0, 1, 1], [], []>} : vector<32x32xf32>, vector<32x64xf32>, vector<32x64xf32> -> vector<32x64xf32>
    %c0_35 = arith.constant 0 : index
    %c0_36 = arith.constant 0 : index
    %c0_37 = arith.constant 0 : index
    %c0_38 = arith.constant 0 : index
    %60 = vector.load %arg5[%c0_35, %c0_36, %c0_37, %c0_38] : memref<1x3x64x64xf32, #tpu.memory_space<vmem>>, vector<1x1x64x64xf32>
    %61 = vector.shape_cast %60 : vector<1x1x64x64xf32> to vector<64x64xf32>
    %cst_39 = arith.constant dense<0.000000e+00> : vector<32x64xf32>
    %62 = tpu.matmul %56, %61, %cst_39 {dimension_numbers = #tpu.dot_dimension_numbers<[1], [0], [0], [1], [0, 0, 1, 1], [], []>} : vector<32x64xf32>, vector<64x64xf32>, vector<32x64xf32> -> vector<32x64xf32>
    %c0_40 = arith.constant 0 : index
    %c1_41 = arith.constant 1 : index
    %c0_42 = arith.constant 0 : index
    %c0_43 = arith.constant 0 : index
    %63 = vector.load %arg5[%c0_40, %c1_41, %c0_42, %c0_43] : memref<1x3x64x64xf32, #tpu.memory_space<vmem>>, vector<1x1x64x64xf32>
    %64 = vector.shape_cast %63 : vector<1x1x64x64xf32> to vector<64x64xf32>
    %cst_44 = arith.constant dense<0.000000e+00> : vector<32x64xf32>
    %65 = tpu.matmul %53, %64, %cst_44 {dimension_numbers = #tpu.dot_dimension_numbers<[1], [0], [0], [1], [0, 0, 1, 1], [], []>} : vector<32x64xf32>, vector<64x64xf32>, vector<32x64xf32> -> vector<32x64xf32>
    %66 = arith.addf %62, %65 : vector<32x64xf32>
    %c0_45 = arith.constant 0 : index
    %c2_46 = arith.constant 2 : index
    %c0_47 = arith.constant 0 : index
    %c0_48 = arith.constant 0 : index
    %67 = vector.load %arg5[%c0_45, %c2_46, %c0_47, %c0_48] : memref<1x3x64x64xf32, #tpu.memory_space<vmem>>, vector<1x1x64x64xf32>
    %68 = vector.shape_cast %67 : vector<1x1x64x64xf32> to vector<64x64xf32>
    %cst_49 = arith.constant dense<0.000000e+00> : vector<32x64xf32>
    %69 = tpu.matmul %59, %68, %cst_49 {dimension_numbers = #tpu.dot_dimension_numbers<[1], [0], [0], [1], [0, 0, 1, 1], [], []>} : vector<32x64xf32>, vector<64x64xf32>, vector<32x64xf32> -> vector<32x64xf32>
    %70 = arith.addf %66, %69 : vector<32x64xf32>
    %cst_50 = arith.constant dense<0.000000e+00> : vector<64xf32>
    %71 = vector.multi_reduction <add>, %70, %cst_50 [0] : vector<32x64xf32> to vector<64xf32>
    %72 = vector.shape_cast %71 : vector<64xf32> to vector<1x64xf32>
    %cst_51 = arith.constant dense<0.000000e+00> : vector<1x64xf32>
    %73 = tpu.matmul %72, %5, %cst_51 {dimension_numbers = #tpu.dot_dimension_numbers<[1], [0], [0], [1], [0, 0, 1, 1], [], []>} : vector<1x64xf32>, vector<64x64xf32>, vector<1x64xf32> -> vector<1x64xf32>
    %cst_52 = arith.constant 0.001953125 : f32
    %74 = vector.broadcast %cst_52 : f32 to vector<1x64xf32>
    %75 = arith.mulf %73, %74 : vector<1x64xf32>
    %76 = vector.broadcast %75 : vector<1x64xf32> to vector<32x64xf32>
    %77 = arith.subf %70, %76 : vector<32x64xf32>
    %78 = arith.mulf %77, %77 : vector<32x64xf32>
    %cst_53 = arith.constant dense<0.000000e+00> : vector<64xf32>
    %79 = vector.multi_reduction <add>, %78, %cst_53 [0] : vector<32x64xf32> to vector<64xf32>
    %80 = vector.shape_cast %79 : vector<64xf32> to vector<1x64xf32>
    %cst_54 = arith.constant dense<0.000000e+00> : vector<1x64xf32>
    %81 = tpu.matmul %80, %5, %cst_54 {dimension_numbers = #tpu.dot_dimension_numbers<[1], [0], [0], [1], [0, 0, 1, 1], [], []>} : vector<1x64xf32>, vector<64x64xf32>, vector<1x64xf32> -> vector<1x64xf32>
    %cst_55 = arith.constant 0.001953125 : f32
    %82 = vector.broadcast %cst_55 : f32 to vector<1x64xf32>
    %83 = arith.mulf %81, %82 : vector<1x64xf32>
    %cst_56 = arith.constant 9.99999974E-6 : f32
    %84 = vector.broadcast %cst_56 : f32 to vector<1x64xf32>
    %85 = arith.addf %83, %84 : vector<1x64xf32>
    %86 = math.rsqrt %85 : vector<1x64xf32>
    %87 = arith.mulf %86, %10 : vector<1x64xf32>
    %88 = vector.broadcast %87 : vector<1x64xf32> to vector<32x64xf32>
    %89 = arith.mulf %77, %88 : vector<32x64xf32>
    %90 = vector.broadcast %11 : vector<1x64xf32> to vector<32x64xf32>
    %91 = arith.addf %89, %90 : vector<32x64xf32>
    %92 = arith.addf %91, %3 : vector<32x64xf32>
    %cst_57 = arith.constant 0.000000e+00 : f32
    %cst_58 = arith.constant 2.000000e+01 : f32
    %93 = vector.broadcast %cst_57 : f32 to vector<32x64xf32>
    %94 = arith.maximumf %93, %92 : vector<32x64xf32>
    %95 = vector.broadcast %cst_58 : f32 to vector<32x64xf32>
    %96 = arith.minimumf %95, %94 : vector<32x64xf32>
    %c0_59 = arith.constant 0 : index
    %c0_60 = arith.constant 0 : index
    %97 = vector.load %arg7[%c0_59, %c0_60] : memref<32x64xf32, #tpu.memory_space<vmem>>, vector<32x64xf32>
    tpu.vector_store %arg7[%c0_59, %c0_60], %96 {strides = array<i32>} : memref<32x64xf32, #tpu.memory_space<vmem>>, vector<32x64xf32>,
    return
  }
  func.func @transform_0(%arg0: i32) -> (i32, i32) {
    %c0_i32 = arith.constant 0 : i32
    %c0_i32_0 = arith.constant 0 : i32
    %c0_i32_1 = arith.constant 0 : i32
    return %c0_i32, %c0_i32_0 : i32, i32
  }
  func.func @transform_1(%arg0: i32) -> (i32, i32, i32) {
    %c0_i32 = arith.constant 0 : i32
    %c0_i32_0 = arith.constant 0 : i32
    %c0_i32_1 = arith.constant 0 : i32
    %c0_i32_2 = arith.constant 0 : i32
    return %c0_i32, %c0_i32_0, %c0_i32_1 : i32, i32, i32
  }
  func.func @transform_2(%arg0: i32) -> (i32, i32) {
    %c0_i32 = arith.constant 0 : i32
    %c0_i32_0 = arith.constant 0 : i32
    %c0_i32_1 = arith.constant 0 : i32
    return %c0_i32, %c0_i32_0 : i32, i32
  }
  func.func @transform_3(%arg0: i32) -> (i32, i32, i32, i32) {
    %c0_i32 = arith.constant 0 : i32
    %c0_i32_0 = arith.constant 0 : i32
    %c0_i32_1 = arith.constant 0 : i32
    %c0_i32_2 = arith.constant 0 : i32
    return %arg0, %c0_i32, %c0_i32_0, %c0_i32_1 : i32, i32, i32, i32
  }
  func.func @transform_4(%arg0: i32) -> (i32, i32, i32, i32) {
    %c0_i32 = arith.constant 0 : i32
    %c0_i32_0 = arith.constant 0 : i32
    %c0_i32_1 = arith.constant 0 : i32
    %c0_i32_2 = arith.constant 0 : i32
    return %arg0, %c0_i32, %c0_i32_0, %c0_i32_1 : i32, i32, i32, i32
  }
  func.func @transform_5(%arg0: i32) -> (i32, i32, i32) {
    %c0_i32 = arith.constant 0 : i32
    %c0_i32_0 = arith.constant 0 : i32
    %c0_i32_1 = arith.constant 0 : i32
    return %arg0, %c0_i32, %c0_i32_0 : i32, i32, i32
  }
  func.func @transform_6(%arg0: i32) -> (i32, i32) {
    %c0_i32 = arith.constant 0 : i32
    %c0_i32_0 = arith.constant 0 : i32
    %c0_i32_1 = arith.constant 0 : i32
    return %c0_i32, %c0_i32_0 : i32, i32
  }
}

</mosaic_0001>

<llo_original>
// kernel: tile.43
$region0: #{tile.43}
  #allocation0 [shape = 's32[1]{0}', space=sflag, size = 0x4, scoped, tag = 'scoped memory for tile.43']
  %s0 = inlined_call_operand.vmem [shape: f32[4], index: 0, kind: input, shape index: {}]
  %s1 = inlined_call_operand.vmem [shape: f32[16,4], index: 1, kind: output, shape index: {}]
  // Predicated region
  $region2: #{tile.43} parent=0 // pred_check
    _
  $region3: #{tile.43} parent=0 // pred_check_branch
    %3 = sbr.rel (0) target = $region5
  $region4: #{tile.43} parent=0 // pred_region
    _
  $region5: #{tile.43} parent=0 // pred_fallthru
    _
  %v4 = vld [vmem:[%s0] ss:$0 sm:$0xff]
  %5 = vst [vmem:[%s1] sm:$0xff] %v4
  %s6 = scalar_lea.vmem %s1, 8
  %7 = vst [vmem:[%s6] sm:$0xff] %v4

// kernel: tile.56
$region0: #{tile.56}
  %s0 = inlined_call_operand.vmem [shape: f32[16,4], index: 0, kind: input, shape index: {}]
  %s1 = inlined_call_operand.vmem [shape: f32[1,64], index: 1, kind: output, shape index: {}]
  $region1: #{tile.56} parent=0
    #allocation0 [shape = 'u8[4096]{0}', space=vmem, size = 0x1000, scoped, tag = 'scoped mem for output reshape']
    %v2 = vld [vmem:[%s0] sm:$0x1]
    %vm3 = vcmask 31744
    %4 = vst.msk [vmem:[#allocation0] sm:$0x1] %vm3, %v2
    %s5 = scalar_lea.vmem %s0, 15
    %v6 = vld [vmem:[%s5] sm:$0x1]
    %7 = vrot.lane.b32.xlu0 %v6, 60
    %v8 = vpop.permute.xlu0 %7
    %vm9 = vcmask 523744
    %10 = vst.msk [vmem:[#allocation0] sm:$0x1] %vm9, %v8
    %s11 = scalar_lea.vmem %s0, 14
    %v12 = vld [vmem:[%s11] sm:$0x1]
    %13 = vrot.lane.b32.xlu0 %v12, 56
    %v14 = vpop.permute.xlu0 %13
    %vm15 = vcmask 490944
    %16 = vst.msk [vmem:[#allocation0] sm:$0x1] %vm15, %v14
    %s17 = scalar_lea.vmem %s0, 13
    %v18 = vld [vmem:[%s17] sm:$0x1]
    %19 = vrot.lane.b32.xlu0 %v18, 52
    %v20 = vpop.permute.xlu0 %19
    %vm21 = vcmask 458144
    %22 = vst.msk [vmem:[#allocation0] sm:$0x1] %vm21, %v20
    %s23 = scalar_lea.vmem %s0, 12
    %v24 = vld [vmem:[%s23] sm:$0x1]
    %25 = vrot.lane.b32.xlu0 %v24, 48
    %v26 = vpop.permute.xlu0 %25
    %vm27 = vcmask 425344
    %28 = vst.msk [vmem:[#allocation0] sm:$0x1] %vm27, %v26
    %s29 = scalar_lea.vmem %s0, 11
    %v30 = vld [vmem:[%s29] sm:$0x1]
    %31 = vrot.lane.b32.xlu0 %v30, 44
    %v32 = vpop.permute.xlu0 %31
    %vm33 = vcmask 392544
    %34 = vst.msk [vmem:[#allocation0] sm:$0x1] %vm33, %v32
    %s35 = scalar_lea.vmem %s0, 10
    %v36 = vld [vmem:[%s35] sm:$0x1]
    %37 = vrot.lane.b32.xlu0 %v36, 40
    %v38 = vpop.permute.xlu0 %37
    %vm39 = vcmask 359744
    %40 = vst.msk [vmem:[#allocation0] sm:$0x1] %vm39, %v38
    %s41 = scalar_lea.vmem %s0, 9
    %v42 = vld [vmem:[%s41] sm:$0x1]
    %43 = vrot.lane.b32.xlu0 %v42, 36
    %v44 = vpop.permute.xlu0 %43
    %vm45 = vcmask 326944
    %46 = vst.msk [vmem:[#allocation0] sm:$0x1] %vm45, %v44
    %s47 = scalar_lea.vmem %s0, 8
    %v48 = vld [vmem:[%s47] sm:$0x1]
    %49 = vrot.lane.b32.xlu0 %v48, 32
    %v50 = vpop.permute.xlu0 %49
    %vm51 = vcmask 294144
    %52 = vst.msk [vmem:[#allocation0] sm:$0x1] %vm51, %v50
    %s53 = scalar_lea.vmem %s0, 7
    %v54 = vld [vmem:[%s53] sm:$0x1]
    %55 = vrot.lane.b32.xlu0 %v54, 28
    %v56 = vpop.permute.xlu0 %55
    %vm57 = vcmask 261344
    %58 = vst.msk [vmem:[#allocation0] sm:$0x1] %vm57, %v56
    %s59 = scalar_lea.vmem %s0, 6
    %v60 = vld [vmem:[%s59] sm:$0x1]
    %61 = vrot.lane.b32.xlu0 %v60, 24
    %v62 = vpop.permute.xlu0 %61
    %vm63 = vcmask 228544
    %64 = vst.msk [vmem:[#allocation0] sm:$0x1] %vm63, %v62
    %s65 = scalar_lea.vmem %s0, 5
    %v66 = vld [vmem:[%s65] sm:$0x1]
    %67 = vrot.lane.b32.xlu0 %v66, 20
    %v68 = vpop.permute.xlu0 %67
    %vm69 = vcmask 195744
    %70 = vst.msk [vmem:[#allocation0] sm:$0x1] %vm69, %v68
    %s71 = scalar_lea.vmem %s0, 4
    %v72 = vld [vmem:[%s71] sm:$0x1]
    %73 = vrot.lane.b32.xlu0 %v72, 16
    %v74 = vpop.permute.xlu0 %73
    %vm75 = vcmask 162944
    %76 = vst.msk [vmem:[#allocation0] sm:$0x1] %vm75, %v74
    %s77 = scalar_lea.vmem %s0, 3
    %v78 = vld [vmem:[%s77] sm:$0x1]
    %79 = vrot.lane.b32.xlu0 %v78, 12
    %v80 = vpop.permute.xlu0 %79
    %vm81 = vcmask 130144
    %82 = vst.msk [vmem:[#allocation0] sm:$0x1] %vm81, %v80
    %s83 = scalar_lea.vmem %s0, 2
    %v84 = vld [vmem:[%s83] sm:$0x1]
    %85 = vrot.lane.b32.xlu0 %v84, 8
    %v86 = vpop.permute.xlu0 %85
    %vm87 = vcmask 97344
    %88 = vst.msk [vmem:[#allocation0] sm:$0x1] %vm87, %v86
    %s89 = scalar_lea.vmem %s0, 1
    %v90 = vld [vmem:[%s89] sm:$0x1]
    %91 = vrot.lane.b32.xlu0 %v90, 4
    %v92 = vpop.permute.xlu0 %91
    %vm93 = vcmask 64544
    %94 = vst.msk [vmem:[#allocation0] sm:$0x1] %vm93, %v92
    %s96 = ssub.s32 2, 1
    %v97 = vld [vmem:[#allocation0] sm:%s96]
    %s99 = ssub.s32 2, 1
    %100 = vst [vmem:[%s1] sm:%s99] %v97

// kernel: resnet_forward.1
$region0: #{resnet_forward.1}
  #allocation0 [shape = 'u32[]', space=smem, size = 0x4, offset = 0x4, fixed_abs, tag = 'smem constant byte address 0x4 - core index']
  #allocation1 [shape = 'u32[72,128]{1,0:T(1,128)}', space=vmem, size = 0x9000, scoped, tag = 'internal scratch']
  %s0 = inlined_call_operand.vmem [shape: f32[32,64], index: 0, kind: input, shape index: {}]
  %s1 = inlined_call_operand.vmem [shape: f32[2,32,32], index: 1, kind: input, shape index: {}]
  %s2 = inlined_call_operand.vmem [shape: f32[64,64], index: 2, kind: input, shape index: {}]
  %s3 = inlined_call_operand.vmem [shape: f32[2,3,64,64], index: 3, kind: input, shape index: {}]
  %s4 = inlined_call_operand.vmem [shape: f32[2,3,64,64], index: 4, kind: input, shape index: {}]
  %s5 = inlined_call_operand.vmem [shape: f32[2,4,64], index: 5, kind: input, shape index: {}]
  %s6 = inlined_call_operand.vmem [shape: f32[32,64], index: 6, kind: output, shape index: {}]
  %s7 = sld [smem:[#allocation0]]
  $region61: #{resnet_forward.1} parent=0
    _
  %s9 = ssub.s32 1, %s7
  %s10 = scalar_select 0, %s9, %s7
  loop: start=0, step=1, limit=4
  $region2: #{resnet_forward.1} parent=0 // loop_pre_header
    _
  $region3: #{resnet_forward.1} parent=0 // loop_header
    %s12 = sphi 0, %s16
    %p13 = scmp.ge.s32.totalorder %s12, 4
    %s20 = sphi 0, %s20
    %s22 = sphi 0, %s20
    %s23 = sphi 0, %s22
    %s37 = sphi 0, %s23
    %s41 = sphi 0, %s41
    %s43 = sphi 0, %s41
    %s44 = sphi 0, %s43
    %s58 = sphi 0, %s44
    %s62 = sphi 0, %s62
    %s64 = sphi 0, %s62
    %s65 = sphi 0, %s64
    %s79 = sphi 0, %s65
    %s85 = sphi 0, %s87
    %s88 = sphi 0, %s85
    %s89 = sphi 0, %s88
    %s105 = sphi 0, %s89
    %s111 = sphi 0, %s113
    %s114 = sphi 0, %s111
    %s115 = sphi 0, %s114
    %s131 = sphi 0, %s115
    %s137 = sphi 0, %s139
    %s140 = sphi 0, %s137
    %s141 = sphi 0, %s140
    %s157 = sphi 0, %s141
    %s161 = sphi 0, %s161
    %s163 = sphi 0, %s161
    %s164 = sphi 0, %s163
    %s178 = sphi 0, %s164
  $region4: #{resnet_forward.1} parent=0 // loop_header_branch
    %15 = sbr.rel (%p13) target = $region8
  $region5: #{resnet_forward.1} parent=0 // loop_body
    %s17 = ssub.s32 %s12, 1
    %s18 = ssub.s32 %s12, 2
    %s19 = sadd.s32 %s12, 1
    %s21 = sadd.s32 %s20, 1
    %p24 = scmp.eq.s32.totalorder %s12, 1
    %p25 = scmp.ne.s32.totalorder %s20, %s22
    %p26 = scmp.eq.s32.totalorder %s12, 0
    %p27 = por %p25, %p26
    %p28 = scmp.ne.s32.totalorder %s20, %s22
    %p29 = scmp.eq.s32.totalorder %s17, 1
    %p30 = por %p28, %p29
    %p31 = scmp.ne.s32.totalorder %s22, %s23
    %p32 = scmp.eq.s32.totalorder %s17, 0
    %p33 = por %p31, %p32
    %p34 = scmp.ne.s32.totalorder %s22, %s23
    %p35 = scmp.eq.s32.totalorder %s18, 1
    %p36 = por %p34, %p35
    %p38 = scmp.ne.s32.totalorder %s23, %s37
    %p39 = scmp.eq.s32.totalorder %s18, 0
    %p40 = por %p38, %p39
    %s42 = sadd.s32 %s41, 1
    %p45 = scmp.eq.s32.totalorder %s12, 1
    %p46 = scmp.ne.s32.totalorder %s41, %s43
    %p47 = scmp.eq.s32.totalorder %s12, 0
    %p48 = por %p46, %p47
    %p49 = scmp.ne.s32.totalorder %s41, %s43
    %p50 = scmp.eq.s32.totalorder %s17, 1
    %p51 = por %p49, %p50
    %p52 = scmp.ne.s32.totalorder %s43, %s44
    %p53 = scmp.eq.s32.totalorder %s17, 0
    %p54 = por %p52, %p53
    %p55 = scmp.ne.s32.totalorder %s43, %s44
    %p56 = scmp.eq.s32.totalorder %s18, 1
    %p57 = por %p55, %p56
    %p59 = scmp.ne.s32.totalorder %s44, %s58
    %p60 = scmp.eq.s32.totalorder %s18, 0
    %p61 = por %p59, %p60
    %s63 = sadd.s32 %s62, 1
    %p66 = scmp.eq.s32.totalorder %s12, 1
    %p67 = scmp.ne.s32.totalorder %s62, %s64
    %p68 = scmp.eq.s32.totalorder %s12, 0
    %p69 = por %p67, %p68
    %p70 = scmp.ne.s32.totalorder %s62, %s64
    %p71 = scmp.eq.s32.totalorder %s17, 1
    %p72 = por %p70, %p71
    %p73 = scmp.ne.s32.totalorder %s64, %s65
    %p74 = scmp.eq.s32.totalorder %s17, 0
    %p75 = por %p73, %p74
    %p76 = scmp.ne.s32.totalorder %s64, %s65
    %p77 = scmp.eq.s32.totalorder %s18, 1
    %p78 = por %p76, %p77
    %p80 = scmp.ne.s32.totalorder %s65, %s79
    %p81 = scmp.eq.s32.totalorder %s18, 0
    %p82 = por %p80, %p81
    %s83 = ssub.s32 %s12, %s19
    %p84 = scmp.eq.s32.totalorder %s83, 0
    %s86 = sadd.s32 %s85, 1
    %s87 = scalar_select %p84, %s85, %s86
    %p90 = pneg %p84
    %p91 = scmp.eq.s32.totalorder %s12, 1
    %p92 = por %p90, %p91
    %p93 = scmp.ne.s32.totalorder %s85, %s88
    %p94 = scmp.eq.s32.totalorder %s12, 0
    %p95 = por %p93, %p94
    %p96 = scmp.ne.s32.totalorder %s85, %s88
    %p97 = scmp.eq.s32.totalorder %s17, 1
    %p98 = por %p96, %p97
    %p99 = scmp.ne.s32.totalorder %s88, %s89
    %p100 = scmp.eq.s32.totalorder %s17, 0
    %p101 = por %p99, %p100
    %p102 = scmp.ne.s32.totalorder %s88, %s89
    %p103 = scmp.eq.s32.totalorder %s18, 1
    %p104 = por %p102, %p103
    %p106 = scmp.ne.s32.totalorder %s89, %s105
    %p107 = scmp.eq.s32.totalorder %s18, 0
    %p108 = por %p106, %p107
    %s109 = ssub.s32 %s12, %s19
    %p110 = scmp.eq.s32.totalorder %s109, 0
    %s112 = sadd.s32 %s111, 1
    %s113 = scalar_select %p110, %s111, %s112
    %p116 = pneg %p110
    %p117 = scmp.eq.s32.totalorder %s12, 1
    %p118 = por %p116, %p117
    %p119 = scmp.ne.s32.totalorder %s111, %s114
    %p120 = scmp.eq.s32.totalorder %s12, 0
    %p121 = por %p119, %p120
    %p122 = scmp.ne.s32.totalorder %s111, %s114
    %p123 = scmp.eq.s32.totalorder %s17, 1
    %p124 = por %p122, %p123
    %p125 = scmp.ne.s32.totalorder %s114, %s115
    %p126 = scmp.eq.s32.totalorder %s17, 0
    %p127 = por %p125, %p126
    %p128 = scmp.ne.s32.totalorder %s114, %s115
    %p129 = scmp.eq.s32.totalorder %s18, 1
    %p130 = por %p128, %p129
    %p132 = scmp.ne.s32.totalorder %s115, %s131
    %p133 = scmp.eq.s32.totalorder %s18, 0
    %p134 = por %p132, %p133
    %s135 = ssub.s32 %s12, %s19
    %p136 = scmp.eq.s32.totalorder %s135, 0
    %s138 = sadd.s32 %s137, 1
    %s139 = scalar_select %p136, %s137, %s138
    %p142 = pneg %p136
    %p143 = scmp.eq.s32.totalorder %s12, 1
    %p144 = por %p142, %p143
    %p145 = scmp.ne.s32.totalorder %s137, %s140
    %p146 = scmp.eq.s32.totalorder %s12, 0
    %p147 = por %p145, %p146
    %p148 = scmp.ne.s32.totalorder %s137, %s140
    %p149 = scmp.eq.s32.totalorder %s17, 1
    %p150 = por %p148, %p149
    %p151 = scmp.ne.s32.totalorder %s140, %s141
    %p152 = scmp.eq.s32.totalorder %s17, 0
    %p153 = por %p151, %p152
    %p154 = scmp.ne.s32.totalorder %s140, %s141
    %p155 = scmp.eq.s32.totalorder %s18, 1
    %p156 = por %p154, %p155
    %p158 = scmp.ne.s32.totalorder %s141, %s157
    %p159 = scmp.eq.s32.totalorder %s18, 0
    %p160 = por %p158, %p159
    %s162 = sadd.s32 %s161, 1
    %p165 = scmp.eq.s32.totalorder %s12, 1
    %p166 = scmp.ne.s32.totalorder %s161, %s163
    %p167 = scmp.eq.s32.totalorder %s12, 0
    %p168 = por %p166, %p167
    %p169 = scmp.ne.s32.totalorder %s161, %s163
    %p170 = scmp.eq.s32.totalorder %s17, 1
    %p171 = por %p169, %p170
    %p172 = scmp.ne.s32.totalorder %s163, %s164
    %p173 = scmp.eq.s32.totalorder %s17, 0
    %p174 = por %p172, %p173
    %p175 = scmp.ne.s32.totalorder %s163, %s164
    %p176 = scmp.eq.s32.totalorder %s18, 1
    %p177 = por %p175, %p176
    %p179 = scmp.ne.s32.totalorder %s164, %s178
    %p180 = scmp.eq.s32.totalorder %s18, 0
    %p181 = por %p179, %p180
    %p182 = scmp.le.s32.totalorder 1, %s12
    %p183 = scmp.lt.s32.totalorder %s12, 3
    %p184 = pnand %p182, %p183
    %p185 = pneg %p184
    // Predicated region
    $region9: #{resnet_forward.1} parent=5 // pred_check
      _
    $region10: #{resnet_forward.1} parent=5 // pred_check_branch
      %187 = sbr.rel (%p184) target = $region12
    $region11: #{resnet_forward.1} parent=5 // pred_region
      %s188 = ssub.s32 %s12, 1
      // Predicated region
      $region13: #{resnet_forward.1} parent=11 // pred_check
        %p189 = pneg %p33
      $region14: #{resnet_forward.1} parent=11 // pred_check_branch
        %191 = sbr.rel (%p189) target = $region16
      $region15: #{resnet_forward.1} parent=11 // pred_region
        _
      $region16: #{resnet_forward.1} parent=11 // pred_fallthru
        _
      // Predicated region
      $region17: #{resnet_forward.1} parent=11 // pred_check
        %p192 = pneg %p54
      $region18: #{resnet_forward.1} parent=11 // pred_check_branch
        %194 = sbr.rel (%p192) target = $region20
      $region19: #{resnet_forward.1} parent=11 // pred_region
        _
      $region20: #{resnet_forward.1} parent=11 // pred_fallthru
        _
      // Predicated region
      $region21: #{resnet_forward.1} parent=11 // pred_check
        %p195 = pneg %p75
      $region22: #{resnet_forward.1} parent=11 // pred_check_branch
        %197 = sbr.rel (%p195) target = $region24
      $region23: #{resnet_forward.1} parent=11 // pred_region
        _
      $region24: #{resnet_forward.1} parent=11 // pred_fallthru
        _
    $region12: #{resnet_forward.1} parent=5 // pred_fallthru
      _
    %p198 = scmp.lt.s32.totalorder %s12, 2
    // Predicated region
    $region25: #{resnet_forward.1} parent=5 // pred_check
      %p199 = pneg %p198
    $region26: #{resnet_forward.1} parent=5 // pred_check_branch
      %201 = sbr.rel (%p199) target = $region28
    $region27: #{resnet_forward.1} parent=5 // pred_region
      // Predicated region
      $region29: #{resnet_forward.1} parent=27 // pred_check
        %p202 = pneg %p95
      $region30: #{resnet_forward.1} parent=27 // pred_check_branch
        %204 = sbr.rel (%p202) target = $region32
      $region31: #{resnet_forward.1} parent=27 // pred_region
        %p205 = scmp.lt.s32.totalorder %s12, 1
        %s206 = scalar_select %p205, %s12, 1
        %s207 = smul.addr %s206, 24
        %s208 = smul.addr %s207, 8
        %s209 = scalar_lea.vmem %s3, %s208
      $region32: #{resnet_forward.1} parent=27 // pred_fallthru
        _
      // Predicated region
      $region33: #{resnet_forward.1} parent=27 // pred_check
        %p210 = pneg %p121
      $region34: #{resnet_forward.1} parent=27 // pred_check_branch
        %212 = sbr.rel (%p210) target = $region36
      $region35: #{resnet_forward.1} parent=27 // pred_region
        %p213 = scmp.lt.s32.totalorder %s12, 1
        %s214 = scalar_select %p213, %s12, 1
        %s215 = smul.addr %s214, 24
        %s216 = smul.addr %s215, 8
        %s217 = scalar_lea.vmem %s4, %s216
      $region36: #{resnet_forward.1} parent=27 // pred_fallthru
        _
      // Predicated region
      $region37: #{resnet_forward.1} parent=27 // pred_check
        %p218 = pneg %p147
      $region38: #{resnet_forward.1} parent=27 // pred_check_branch
        %220 = sbr.rel (%p218) target = $region40
      $region39: #{resnet_forward.1} parent=27 // pred_region
        %p221 = scmp.lt.s32.totalorder %s12, 1
        %s222 = scalar_select %p221, %s12, 1
        %s223 = smul.addr %s222, 4
        %s224 = scalar_lea.vmem %s5, %s223
      $region40: #{resnet_forward.1} parent=27 // pred_fallthru
        _
    $region28: #{resnet_forward.1} parent=5 // pred_fallthru
      _
    %p225 = scmp.le.s32.totalorder 1, %s12
    %p226 = scmp.lt.s32.totalorder %s12, 3
    %p227 = pnand %p225, %p226
    %p228 = pneg %p227
    // Predicated region
    $region41: #{resnet_forward.1} parent=5 // pred_check
      _
    $region42: #{resnet_forward.1} parent=5 // pred_check_branch
      %230 = sbr.rel (%p227) target = $region44
    $region43: #{resnet_forward.1} parent=5 // pred_region
      %s231 = ssub.s32 %s12, 1
      %p232 = pneg %p33
      %p233 = pneg %p30
      %p234 = pneg %p54
      %p235 = pneg %p51
      %p236 = pneg %p75
      %p237 = pneg %p72
      %p238 = scmp.lt.s32.totalorder %s17, 1
      %s239 = scalar_select %p238, %s17, 1
      %s240 = smul.addr %s239, 24
      %s241 = smul.addr %s240, 8
      %s242 = scalar_lea.vmem %s3, %s241
      %p243 = pneg %p101
      %p244 = pneg %p98
      %p245 = scmp.lt.s32.totalorder %s17, 1
      %s246 = scalar_select %p245, %s17, 1
      %s247 = smul.addr %s246, 24
      %s248 = smul.addr %s247, 8
      %s249 = scalar_lea.vmem %s4, %s248
      %p250 = pneg %p127
      %p251 = pneg %p124
      %p252 = scmp.lt.s32.totalorder %s17, 1
      %s253 = scalar_select %p252, %s17, 1
      %s254 = smul.addr %s253, 4
      %s255 = scalar_lea.vmem %s5, %s254
      %p256 = pneg %p153
      %p257 = pneg %p150
      %p258 = pneg %p174
      %p259 = pneg %p171
      %p260 = scmp.lt.s32.totalorder %s17, 1
      %s261 = scalar_select %p260, %s17, 1
      %s262 = smul.addr %s261, 24
      %s263 = smul.addr %s262, 8
      %s264 = scalar_lea.vmem %s3, %s263
      %p265 = scmp.lt.s32.totalorder %s17, 1
      %s266 = scalar_select %p265, %s17, 1
      %s267 = smul.addr %s266, 24
      %s268 = smul.addr %s267, 8
      %s269 = scalar_lea.vmem %s4, %s268
      %p270 = scmp.lt.s32.totalorder %s17, 1
      %s271 = scalar_select %p270, %s17, 1
      %s272 = smul.addr %s271, 4
      %s273 = scalar_lea.vmem %s5, %s272
      %p274 = scmp.eq.s32.totalorder %s17, 0
      // Predicated region
      $region45: #{resnet_forward.1} parent=43 // pred_check
        %p275 = pneg %p274
      $region46: #{resnet_forward.1} parent=43 // pred_check_branch
        %277 = sbr.rel (%p275) target = $region48
      $region47: #{resnet_forward.1} parent=43 // pred_region
        %v278 = vld [vmem:[%s0] sm:$0xff]
        %v279 = vld [vmem:[%s0 + $0x8] sm:$0xff]
        %v280 = vld [vmem:[%s0 + $0x10] sm:$0xff]
        %v281 = vld [vmem:[%s0 + $0x18] sm:$0xff]
        %vm282 = vcmask 523264
        %283 = vst.msk [vmem:[%s6] sm:$0xff] %vm282, %v278
        %284 = vst.msk [vmem:[%s6 + $0x8] sm:$0xff] %vm282, %v279
        %285 = vst.msk [vmem:[%s6 + $0x10] sm:$0xff] %vm282, %v280
        %286 = vst.msk [vmem:[%s6 + $0x18] sm:$0xff] %vm282, %v281
      $region48: #{resnet_forward.1} parent=43 // pred_fallthru
        _
      %v287 = vld [vmem:[%s6] sm:$0xff]
      %v288 = vld [vmem:[%s6 + $0x8] sm:$0xff]
      %v289 = vld [vmem:[%s6 + $0x10] sm:$0xff]
      %v290 = vld [vmem:[%s6 + $0x18] sm:$0xff]
      %v291 = vld [vmem:[%s1] sm:$0xff]
      %v292 = vld [vmem:[%s1 + $0x8] sm:$0xff]
      %v293 = vld [vmem:[%s1 + $0x10] sm:$0xff]
      %v294 = vld [vmem:[%s1 + $0x18] sm:$0xff]
      %v295 = vld [vmem:[%s1 + $0x20] sm:$0xff]
      %v296 = vld [vmem:[%s1 + $0x28] sm:$0xff]
      %v297 = vld [vmem:[%s1 + $0x30] sm:$0xff]
      %v298 = vld [vmem:[%s1 + $0x38] sm:$0xff]
      %v299 = vld [vmem:[%s2] sm:$0xff]
      %v300 = vld [vmem:[%s2 + $0x8] sm:$0xff]
      %v301 = vld [vmem:[%s2 + $0x10] sm:$0xff]
      %v302 = vld [vmem:[%s2 + $0x18] sm:$0xff]
      %v303 = vld [vmem:[%s2 + $0x20] sm:$0xff]
      %v304 = vld [vmem:[%s2 + $0x28] sm:$0xff]
      %v305 = vld [vmem:[%s2 + $0x30] sm:$0xff]
      %v306 = vld [vmem:[%s2 + $0x38] sm:$0xff]
      %v307 = vld [vmem:[%s273] sm:$0xf]
      %vm308 = vcmask 261120
      %v310 = vsel %vm308, %v291, 0
      %v313 = vsel %vm308, %v292, 0
      %v316 = vsel %vm308, %v293, 0
      %v319 = vsel %vm308, %v294, 0
      %321 = vmatpush.msra.mxu0 0.0
      %322 = vmatpush.msra.mxu0 0.0
      %323 = vmatpush.msra.mxu0 0.0
      %324 = vmatpush.msra.mxu0 0.0
      %325 = vmatpush.msra.mxu0 0.0
      %326 = vmatpush.msra.mxu0 0.0
      %327 = vmatpush.msra.mxu0 0.0
      %328 = vmatpush.msra.mxu0 0.0
      %329 = vmatpush.msra.mxu0 0.0
      %330 = vmatpush.msra.mxu0 0.0
      %331 = vmatpush.msra.mxu0 0.0
      %332 = vmatpush.msra.mxu0 0.0
      %333 = vmatpush.msra.mxu0 %v290
      %334 = vmatpush.msra.mxu0 %v289
      %335 = vmatpush.msra.mxu0 %v288
      %336 = vmatpush.msra.mxu0 %v287
      %337 = vmatmul.f32.gmra.mxu0 %v310
      %v338 = vpop.f32.mrf.mxu0
      %v339 = vadd.f32 0.0, %v338
      %340 = vmatmul.f32.gmra.mxu0 %v313
      %v341 = vpop.f32.mrf.mxu0
      %v342 = vadd.f32 0.0, %v341
      %343 = vmatmul.f32.gmra.mxu0 %v316
      %v344 = vpop.f32.mrf.mxu0
      %v345 = vadd.f32 0.0, %v344
      %346 = vmatmul.f32.gmra.mxu0 %v319
      %v347 = vpop.f32.mrf.mxu0
      %v348 = vadd.f32 0.0, %v347
      %349 = vdwg.mxu0
      %v351 = vsel %vm308, %v295, 0
      %v354 = vsel %vm308, %v296, 0
      %v357 = vsel %vm308, %v297, 0
      %v360 = vsel %vm308, %v298, 0
      %362 = vmatpush.msra.mxu0 0.0
      %363 = vmatpush.msra.mxu0 0.0
      %364 = vmatpush.msra.mxu0 0.0
      %365 = vmatpush.msra.mxu0 0.0
      %366 = vmatpush.msra.mxu0 0.0
      %367 = vmatpush.msra.mxu0 0.0
      %368 = vmatpush.msra.mxu0 0.0
      %369 = vmatpush.msra.mxu0 0.0
      %370 = vmatpush.msra.mxu0 0.0
      %371 = vmatpush.msra.mxu0 0.0
      %372 = vmatpush.msra.mxu0 0.0
      %373 = vmatpush.msra.mxu0 0.0
      %374 = vmatpush.msra.mxu0 %v290
      %375 = vmatpush.msra.mxu0 %v289
      %376 = vmatpush.msra.mxu0 %v288
      %377 = vmatpush.msra.mxu0 %v287
      %378 = vmatmul.f32.gmra.mxu0 %v351
      %v379 = vpop.f32.mrf.mxu0
      %v380 = vadd.f32 0.0, %v379
      %381 = vmatmul.f32.gmra.mxu0 %v354
      %v382 = vpop.f32.mrf.mxu0
      %v383 = vadd.f32 0.0, %v382
      %384 = vmatmul.f32.gmra.mxu0 %v357
      %v385 = vpop.f32.mrf.mxu0
      %v386 = vadd.f32 0.0, %v385
      %387 = vmatmul.f32.gmra.mxu0 %v360
      %v388 = vpop.f32.mrf.mxu0
      %v389 = vadd.f32 0.0, %v388
      %390 = vdwg.mxu0
      %v391 = vld [vmem:[%s264] sm:$0xff]
      %v392 = vld [vmem:[%s264 + $0x8] sm:$0xff]
      %v393 = vld [vmem:[%s264 + $0x10] sm:$0xff]
      %v394 = vld [vmem:[%s264 + $0x18] sm:$0xff]
      %v395 = vld [vmem:[%s264 + $0x20] sm:$0xff]
      %v396 = vld [vmem:[%s264 + $0x28] sm:$0xff]
      %v397 = vld [vmem:[%s264 + $0x30] sm:$0xff]
      %v398 = vld [vmem:[%s264 + $0x38] sm:$0xff]
      %s399 = scalar_lea.vmem %s264, 64
      %v400 = vld [vmem:[%s399] sm:$0xff]
      %v401 = vld [vmem:[%s399 + $0x8] sm:$0xff]
      %v402 = vld [vmem:[%s399 + $0x10] sm:$0xff]
      %v403 = vld [vmem:[%s399 + $0x18] sm:$0xff]
      %v404 = vld [vmem:[%s399 + $0x20] sm:$0xff]
      %v405 = vld [vmem:[%s399 + $0x28] sm:$0xff]
      %v406 = vld [vmem:[%s399 + $0x30] sm:$0xff]
      %v407 = vld [vmem:[%s399 + $0x38] sm:$0xff]
      %vm408 = vcmask 523264
      %v410 = vsel %vm408, %v287, 0
      %v413 = vsel %vm408, %v288, 0
      %v416 = vsel %vm408, %v289, 0
      %v419 = vsel %vm408, %v290, 0
      %421 = vmatpush.msra.mxu0 0.0
      %422 = vmatpush.msra.mxu0 0.0
      %423 = vmatpush.msra.mxu0 0.0
      %424 = vmatpush.msra.mxu0 0.0
      %425 = vmatpush.msra.mxu0 0.0
      %426 = vmatpush.msra.mxu0 0.0
      %427 = vmatpush.msra.mxu0 0.0
      %428 = vmatpush.msra.mxu0 0.0
      %429 = vmatpush.msra.mxu0 %v407
      %430 = vmatpush.msra.mxu0 %v406
      %431 = vmatpush.msra.mxu0 %v405
      %432 = vmatpush.msra.mxu0 %v404
      %433 = vmatpush.msra.mxu0 %v403
      %434 = vmatpush.msra.mxu0 %v402
      %435 = vmatpush.msra.mxu0 %v401
      %436 = vmatpush.msra.mxu0 %v400
      %437 = vmatmul.f32.gmra.mxu0 %v410
      %v438 = vpop.f32.mrf.mxu0
      %v439 = vadd.f32 0.0, %v438
      %440 = vmatmul.f32.gmra.mxu0 %v413
      %v441 = vpop.f32.mrf.mxu0
      %v442 = vadd.f32 0.0, %v441
      %443 = vmatmul.f32.gmra.mxu0 %v416
      %v444 = vpop.f32.mrf.mxu0
      %v445 = vadd.f32 0.0, %v444
      %446 = vmatmul.f32.gmra.mxu0 %v419
      %v447 = vpop.f32.mrf.mxu0
      %v448 = vadd.f32 0.0, %v447
      %449 = vdwg.mxu0
      %v451 = vsel %vm408, %v339, 0
      %v454 = vsel %vm408, %v342, 0
      %v457 = vsel %vm408, %v345, 0
      %v460 = vsel %vm408, %v348, 0
      %462 = vmatpush.msra.mxu0 0.0
      %463 = vmatpush.msra.mxu0 0.0
      %464 = vmatpush.msra.mxu0 0.0
      %465 = vmatpush.msra.mxu0 0.0
      %466 = vmatpush.msra.mxu0 0.0
      %467 = vmatpush.msra.mxu0 0.0
      %468 = vmatpush.msra.mxu0 0.0
      %469 = vmatpush.msra.mxu0 0.0
      %470 = vmatpush.msra.mxu0 %v398
      %471 = vmatpush.msra.mxu0 %v397
      %472 = vmatpush.msra.mxu0 %v396
      %473 = vmatpush.msra.mxu0 %v395
      %474 = vmatpush.msra.mxu0 %v394
      %475 = vmatpush.msra.mxu0 %v393
      %476 = vmatpush.msra.mxu0 %v392
      %477 = vmatpush.msra.mxu0 %v391
      %478 = vmatmul.f32.gmra.mxu0 %v451
      %v479 = vpop.f32.mrf.mxu0
      %v480 = vadd.f32 %v439, %v479
      %481 = vmatmul.f32.gmra.mxu0 %v454
      %v482 = vpop.f32.mrf.mxu0
      %v483 = vadd.f32 %v442, %v482
      %484 = vmatmul.f32.gmra.mxu0 %v457
      %v485 = vpop.f32.mrf.mxu0
      %v486 = vadd.f32 %v445, %v485
      %487 = vmatmul.f32.gmra.mxu0 %v460
      %v488 = vpop.f32.mrf.mxu0
      %v489 = vadd.f32 %v448, %v488
      %490 = vdwg.mxu0
      %s491 = scalar_lea.vmem %s264, 128
      %v492 = vld [vmem:[%s491] sm:$0xff]
      %v493 = vld [vmem:[%s491 + $0x8] sm:$0xff]
      %v494 = vld [vmem:[%s491 + $0x10] sm:$0xff]
      %v495 = vld [vmem:[%s491 + $0x18] sm:$0xff]
      %v496 = vld [vmem:[%s491 + $0x20] sm:$0xff]
      %v497 = vld [vmem:[%s491 + $0x28] sm:$0xff]
      %v498 = vld [vmem:[%s491 + $0x30] sm:$0xff]
      %v499 = vld [vmem:[%s491 + $0x38] sm:$0xff]
      %v501 = vsel %vm408, %v380, 0
      %v504 = vsel %vm408, %v383, 0
      %v507 = vsel %vm408, %v386, 0
      %v510 = vsel %vm408, %v389, 0
      %512 = vmatpush.msra.mxu0 0.0
      %513 = vmatpush.msra.mxu0 0.0
      %514 = vmatpush.msra.mxu0 0.0
      %515 = vmatpush.msra.mxu0 0.0
      %516 = vmatpush.msra.mxu0 0.0
      %517 = vmatpush.msra.mxu0 0.0
      %518 = vmatpush.msra.mxu0 0.0
      %519 = vmatpush.msra.mxu0 0.0
      %520 = vmatpush.msra.mxu0 %v499
      %521 = vmatpush.msra.mxu0 %v498
      %522 = vmatpush.msra.mxu0 %v497
      %523 = vmatpush.msra.mxu0 %v496
      %524 = vmatpush.msra.mxu0 %v495
      %525 = vmatpush.msra.mxu0 %v494
      %526 = vmatpush.msra.mxu0 %v493
      %527 = vmatpush.msra.mxu0 %v492
      %528 = vmatmul.f32.gmra.mxu0 %v501
      %v529 = vpop.f32.mrf.mxu0
      %v530 = vadd.f32 0.0, %v529
      %531 = vmatmul.f32.gmra.mxu0 %v504
      %v532 = vpop.f32.mrf.mxu0
      %v533 = vadd.f32 0.0, %v532
      %534 = vmatmul.f32.gmra.mxu0 %v507
      %v535 = vpop.f32.mrf.mxu0
      %v536 = vadd.f32 0.0, %v535
      %537 = vmatmul.f32.gmra.mxu0 %v510
      %v538 = vpop.f32.mrf.mxu0
      %v539 = vadd.f32 0.0, %v538
      %540 = vdwg.mxu0
      %v541 = vadd.f32 %v480, %v530
      %v542 = vadd.f32 %v483, %v533
      %v543 = vadd.f32 %v486, %v536
      %v544 = vadd.f32 %v489, %v539
      %v545 = vsel %vm408, %v541, 0.0
      %v546 = vsel %vm408, %v542, 0.0
      %v547 = vadd.f32 %v545, %v546
      %v548 = vsel %vm408, %v543, 0.0
      %v549 = vadd.f32 %v547, %v548
      %v550 = vsel %vm408, %v544, 0.0
      %v551 = vadd.f32 %v549, %v550
      %v552 = vrot.slane %v551, 4
      %v553 = vadd.f32 %v551, %v552
      %v554 = vrot.slane %v553, 2
      %v555 = vadd.f32 %v553, %v554
      %v556 = vrot.slane %v555, 1
      %v557 = vadd.f32 %v555, %v556
      %v559 = vsel %vm408, %v557, 0
      %561 = vmatpush.msra.mxu0 0.0
      %562 = vmatpush.msra.mxu0 0.0
      %563 = vmatpush.msra.mxu0 0.0
      %564 = vmatpush.msra.mxu0 0.0
      %565 = vmatpush.msra.mxu0 0.0
      %566 = vmatpush.msra.mxu0 0.0
      %567 = vmatpush.msra.mxu0 0.0
      %568 = vmatpush.msra.mxu0 0.0
      %569 = vmatpush.msra.mxu0 %v306
      %570 = vmatpush.msra.mxu0 %v305
      %571 = vmatpush.msra.mxu0 %v304
      %572 = vmatpush.msra.mxu0 %v303
      %573 = vmatpush.msra.mxu0 %v302
      %574 = vmatpush.msra.mxu0 %v301
      %575 = vmatpush.msra.mxu0 %v300
      %576 = vmatpush.msra.mxu0 %v299
      %577 = vmatmul.f32.gmra.mxu0 %v559
      %v578 = vpop.f32.mrf.mxu0
      %v579 = vadd.f32 0.0, %v578
      %580 = vdwg.mxu0
      %v581 = vmul.f32 %v579, 0.001953125
      %v582 = vperm.slane %v581, 0
      %v583 = vsub.f32 %v541, %v582
      %v584 = vsub.f32 %v542, %v582
      %v585 = vsub.f32 %v543, %v582
      %v586 = vsub.f32 %v544, %v582
      %v587 = vmul.f32 %v583, %v583
      %v588 = vmul.f32 %v584, %v584
      %v589 = vmul.f32 %v585, %v585
      %v590 = vmul.f32 %v586, %v586
      %v591 = vsel %vm408, %v587, 0.0
      %v592 = vsel %vm408, %v588, 0.0
      %v593 = vadd.f32 %v591, %v592
      %v594 = vsel %vm408, %v589, 0.0
      %v595 = vadd.f32 %v593, %v594
      %v596 = vsel %vm408, %v590, 0.0
      %v597 = vadd.f32 %v595, %v596
      %v598 = vrot.slane %v597, 4
      %v599 = vadd.f32 %v597, %v598
      %v600 = vrot.slane %v599, 2
      %v601 = vadd.f32 %v599, %v600
      %v602 = vrot.slane %v601, 1
      %v603 = vadd.f32 %v601, %v602
      %v605 = vsel %vm408, %v603, 0
      %607 = vmatpush.msra.mxu0 0.0
      %608 = vmatpush.msra.mxu0 0.0
      %609 = vmatpush.msra.mxu0 0.0
      %610 = vmatpush.msra.mxu0 0.0
      %611 = vmatpush.msra.mxu0 0.0
      %612 = vmatpush.msra.mxu0 0.0
      %613 = vmatpush.msra.mxu0 0.0
      %614 = vmatpush.msra.mxu0 0.0
      %615 = vmatpush.msra.mxu0 %v306
      %616 = vmatpush.msra.mxu0 %v305
      %617 = vmatpush.msra.mxu0 %v304
      %618 = vmatpush.msra.mxu0 %v303
      %619 = vmatpush.msra.mxu0 %v302
      %620 = vmatpush.msra.mxu0 %v301
      %621 = vmatpush.msra.mxu0 %v300
      %622 = vmatpush.msra.mxu0 %v299
      %623 = vmatmul.f32.gmra.mxu0 %v605
      %v624 = vpop.f32.mrf.mxu0
      %v625 = vadd.f32 0.0, %v624
      %626 = vdwg.mxu0
      %v627 = vmul.f32 %v625, 0.001953125
      %v628 = vadd.f32 %v627, 1e-05
      %v629 = vrsqrt.pop %v628
      %v630 = vmul.f32 %v629, %v628
      %v631 = vmul.f32 %v630, %v629
      %v632 = vmul.f32 0.5, %v631
      %v633 = vsub.f32 1.5, %v632
      %v634 = vmul.f32 %v629, %v633
      %vm635 = vweird.f32 %v628
      %vm636 = vweird.f32 %v629
      %vm637 = vmor %vm635, %vm636
      %v638 = vsel %vm637, %v629, %v634
      %v639 = vmul.f32 %v638, %v307
      %v640 = vperm.slane %v639, 0
      %v641 = vmul.f32 %v583, %v640
      %v642 = vmul.f32 %v584, %v640
      %v643 = vmul.f32 %v585, %v640
      %v644 = vmul.f32 %v586, %v640
      %v645 = vperm.slane %v307, 1
      %v646 = vadd.f32 %v641, %v645
      %v647 = vadd.f32 %v642, %v645
      %v648 = vadd.f32 %v643, %v645
      %v649 = vadd.f32 %v644, %v645
      %v650 = vmax.f32 %v646, 0.0
      %v651 = vmax.f32 %v647, 0.0
      %v652 = vmax.f32 %v648, 0.0
      %v653 = vmax.f32 %v649, 0.0
      %v654 = vmin.f32 %v650, 20.0
      %v655 = vmin.f32 %v651, 20.0
      %v656 = vmin.f32 %v652, 20.0
      %v657 = vmin.f32 %v653, 20.0
      %658 = vmatpush.msra.mxu0 0.0
      %659 = vmatpush.msra.mxu0 0.0
      %660 = vmatpush.msra.mxu0 0.0
      %661 = vmatpush.msra.mxu0 0.0
      %662 = vmatpush.msra.mxu0 0.0
      %663 = vmatpush.msra.mxu0 0.0
      %664 = vmatpush.msra.mxu0 0.0
      %665 = vmatpush.msra.mxu0 0.0
      %666 = vmatpush.msra.mxu0 0.0
      %667 = vmatpush.msra.mxu0 0.0
      %668 = vmatpush.msra.mxu0 0.0
      %669 = vmatpush.msra.mxu0 0.0
      %670 = vmatpush.msra.mxu0 %v657
      %671 = vmatpush.msra.mxu0 %v656
      %672 = vmatpush.msra.mxu0 %v655
      %673 = vmatpush.msra.mxu0 %v654
      %674 = vmatmul.f32.gmra.mxu0 %v310
      %v675 = vpop.f32.mrf.mxu0
      %v676 = vadd.f32 0.0, %v675
      %677 = vmatmul.f32.gmra.mxu0 %v313
      %v678 = vpop.f32.mrf.mxu0
      %v679 = vadd.f32 0.0, %v678
      %680 = vmatmul.f32.gmra.mxu0 %v316
      %v681 = vpop.f32.mrf.mxu0
      %v682 = vadd.f32 0.0, %v681
      %683 = vmatmul.f32.gmra.mxu0 %v319
      %v684 = vpop.f32.mrf.mxu0
      %v685 = vadd.f32 0.0, %v684
      %686 = vdwg.mxu0
      %687 = vmatpush.msra.mxu0 0.0
      %688 = vmatpush.msra.mxu0 0.0
      %689 = vmatpush.msra.mxu0 0.0
      %690 = vmatpush.msra.mxu0 0.0
      %691 = vmatpush.msra.mxu0 0.0
      %692 = vmatpush.msra.mxu0 0.0
      %693 = vmatpush.msra.mxu0 0.0
      %694 = vmatpush.msra.mxu0 0.0
      %695 = vmatpush.msra.mxu0 0.0
      %696 = vmatpush.msra.mxu0 0.0
      %697 = vmatpush.msra.mxu0 0.0
      %698 = vmatpush.msra.mxu0 0.0
      %699 = vmatpush.msra.mxu0 %v657
      %700 = vmatpush.msra.mxu0 %v656
      %701 = vmatpush.msra.mxu0 %v655
      %702 = vmatpush.msra.mxu0 %v654
      %703 = vmatmul.f32.gmra.mxu0 %v351
      %v704 = vpop.f32.mrf.mxu0
      %v705 = vadd.f32 0.0, %v704
      %706 = vmatmul.f32.gmra.mxu0 %v354
      %v707 = vpop.f32.mrf.mxu0
      %v708 = vadd.f32 0.0, %v707
      %709 = vmatmul.f32.gmra.mxu0 %v357
      %v710 = vpop.f32.mrf.mxu0
      %v711 = vadd.f32 0.0, %v710
      %712 = vmatmul.f32.gmra.mxu0 %v360
      %v713 = vpop.f32.mrf.mxu0
      %v714 = vadd.f32 0.0, %v713
      %715 = vdwg.mxu0
      %v716 = vld [vmem:[%s269] sm:$0xff]
      %v717 = vld [vmem:[%s269 + $0x8] sm:$0xff]
      %v718 = vld [vmem:[%s269 + $0x10] sm:$0xff]
      %v719 = vld [vmem:[%s269 + $0x18] sm:$0xff]
      %v720 = vld [vmem:[%s269 + $0x20] sm:$0xff]
      %v721 = vld [vmem:[%s269 + $0x28] sm:$0xff]
      %v722 = vld [vmem:[%s269 + $0x30] sm:$0xff]
      %v723 = vld [vmem:[%s269 + $0x38] sm:$0xff]
      %s724 = scalar_lea.vmem %s269, 64
      %v725 = vld [vmem:[%s724] sm:$0xff]
      %v726 = vld [vmem:[%s724 + $0x8] sm:$0xff]
      %v727 = vld [vmem:[%s724 + $0x10] sm:$0xff]
      %v728 = vld [vmem:[%s724 + $0x18] sm:$0xff]
      %v729 = vld [vmem:[%s724 + $0x20] sm:$0xff]
      %v730 = vld [vmem:[%s724 + $0x28] sm:$0xff]
      %v731 = vld [vmem:[%s724 + $0x30] sm:$0xff]
      %v732 = vld [vmem:[%s724 + $0x38] sm:$0xff]
      %v734 = vsel %vm408, %v654, 0
      %v737 = vsel %vm408, %v655, 0
      %v740 = vsel %vm408, %v656, 0
      %v743 = vsel %vm408, %v657, 0
      %745 = vmatpush.msra.mxu0 0.0
      %746 = vmatpush.msra.mxu0 0.0
      %747 = vmatpush.msra.mxu0 0.0
      %748 = vmatpush.msra.mxu0 0.0
      %749 = vmatpush.msra.mxu0 0.0
      %750 = vmatpush.msra.mxu0 0.0
      %751 = vmatpush.msra.mxu0 0.0
      %752 = vmatpush.msra.mxu0 0.0
      %753 = vmatpush.msra.mxu0 %v732
      %754 = vmatpush.msra.mxu0 %v731
      %755 = vmatpush.msra.mxu0 %v730
      %756 = vmatpush.msra.mxu0 %v729
      %757 = vmatpush.msra.mxu0 %v728
      %758 = vmatpush.msra.mxu0 %v727
      %759 = vmatpush.msra.mxu0 %v726
      %760 = vmatpush.msra.mxu0 %v725
      %761 = vmatmul.f32.gmra.mxu0 %v734
      %v762 = vpop.f32.mrf.mxu0
      %v763 = vadd.f32 0.0, %v762
      %764 = vmatmul.f32.gmra.mxu0 %v737
      %v765 = vpop.f32.mrf.mxu0
      %v766 = vadd.f32 0.0, %v765
      %767 = vmatmul.f32.gmra.mxu0 %v740
      %v768 = vpop.f32.mrf.mxu0
      %v769 = vadd.f32 0.0, %v768
      %770 = vmatmul.f32.gmra.mxu0 %v743
      %v771 = vpop.f32.mrf.mxu0
      %v772 = vadd.f32 0.0, %v771
      %773 = vdwg.mxu0
      %v775 = vsel %vm408, %v676, 0
      %v778 = vsel %vm408, %v679, 0
      %v781 = vsel %vm408, %v682, 0
      %v784 = vsel %vm408, %v685, 0
      %786 = vmatpush.msra.mxu0 0.0
      %787 = vmatpush.msra.mxu0 0.0
      %788 = vmatpush.msra.mxu0 0.0
      %789 = vmatpush.msra.mxu0 0.0
      %790 = vmatpush.msra.mxu0 0.0
      %791 = vmatpush.msra.mxu0 0.0
      %792 = vmatpush.msra.mxu0 0.0
      %793 = vmatpush.msra.mxu0 0.0
      %794 = vmatpush.msra.mxu0 %v723
      %795 = vmatpush.msra.mxu0 %v722
      %796 = vmatpush.msra.mxu0 %v721
      %797 = vmatpush.msra.mxu0 %v720
      %798 = vmatpush.msra.mxu0 %v719
      %799 = vmatpush.msra.mxu0 %v718
      %800 = vmatpush.msra.mxu0 %v717
      %801 = vmatpush.msra.mxu0 %v716
      %802 = vmatmul.f32.gmra.mxu0 %v775
      %v803 = vpop.f32.mrf.mxu0
      %v804 = vadd.f32 %v763, %v803
      %805 = vmatmul.f32.gmra.mxu0 %v778
      %v806 = vpop.f32.mrf.mxu0
      %v807 = vadd.f32 %v766, %v806
      %808 = vmatmul.f32.gmra.mxu0 %v781
      %v809 = vpop.f32.mrf.mxu0
      %v810 = vadd.f32 %v769, %v809
      %811 = vmatmul.f32.gmra.mxu0 %v784
      %v812 = vpop.f32.mrf.mxu0
      %v813 = vadd.f32 %v772, %v812
      %814 = vdwg.mxu0
      %s815 = scalar_lea.vmem %s269, 128
      %v816 = vld [vmem:[%s815] sm:$0xff]
      %v817 = vld [vmem:[%s815 + $0x8] sm:$0xff]
      %v818 = vld [vmem:[%s815 + $0x10] sm:$0xff]
      %v819 = vld [vmem:[%s815 + $0x18] sm:$0xff]
      %v820 = vld [vmem:[%s815 + $0x20] sm:$0xff]
      %v821 = vld [vmem:[%s815 + $0x28] sm:$0xff]
      %v822 = vld [vmem:[%s815 + $0x30] sm:$0xff]
      %v823 = vld [vmem:[%s815 + $0x38] sm:$0xff]
      %v825 = vsel %vm408, %v705, 0
      %v828 = vsel %vm408, %v708, 0
      %v831 = vsel %vm408, %v711, 0
      %v834 = vsel %vm408, %v714, 0
      %836 = vmatpush.msra.mxu0 0.0
      %837 = vmatpush.msra.mxu0 0.0
      %838 = vmatpush.msra.mxu0 0.0
      %839 = vmatpush.msra.mxu0 0.0
      %840 = vmatpush.msra.mxu0 0.0
      %841 = vmatpush.msra.mxu0 0.0
      %842 = vmatpush.msra.mxu0 0.0
      %843 = vmatpush.msra.mxu0 0.0
      %844 = vmatpush.msra.mxu0 %v823
      %845 = vmatpush.msra.mxu0 %v822
      %846 = vmatpush.msra.mxu0 %v821
      %847 = vmatpush.msra.mxu0 %v820
      %848 = vmatpush.msra.mxu0 %v819
      %849 = vmatpush.msra.mxu0 %v818
      %850 = vmatpush.msra.mxu0 %v817
      %851 = vmatpush.msra.mxu0 %v816
      %852 = vmatmul.f32.gmra.mxu0 %v825
      %v853 = vpop.f32.mrf.mxu0
      %v854 = vadd.f32 0.0, %v853
      %855 = vmatmul.f32.gmra.mxu0 %v828
      %v856 = vpop.f32.mrf.mxu0
      %v857 = vadd.f32 0.0, %v856
      %858 = vmatmul.f32.gmra.mxu0 %v831
      %v859 = vpop.f32.mrf.mxu0
      %v860 = vadd.f32 0.0, %v859
      %861 = vmatmul.f32.gmra.mxu0 %v834
      %v862 = vpop.f32.mrf.mxu0
      %v863 = vadd.f32 0.0, %v862
      %864 = vdwg.mxu0
      %v865 = vadd.f32 %v804, %v854
      %v866 = vadd.f32 %v807, %v857
      %v867 = vadd.f32 %v810, %v860
      %v868 = vadd.f32 %v813, %v863
      %v869 = vsel %vm408, %v865, 0.0
      %v870 = vsel %vm408, %v866, 0.0
      %v871 = vadd.f32 %v869, %v870
      %v872 = vsel %vm408, %v867, 0.0
      %v873 = vadd.f32 %v871, %v872
      %v874 = vsel %vm408, %v868, 0.0
      %v875 = vadd.f32 %v873, %v874
      %v876 = vrot.slane %v875, 4
      %v877 = vadd.f32 %v875, %v876
      %v878 = vrot.slane %v877, 2
      %v879 = vadd.f32 %v877, %v878
      %v880 = vrot.slane %v879, 1
      %v881 = vadd.f32 %v879, %v880
      %v883 = vsel %vm408, %v881, 0
      %885 = vmatpush.msra.mxu0 0.0
      %886 = vmatpush.msra.mxu0 0.0
      %887 = vmatpush.msra.mxu0 0.0
      %888 = vmatpush.msra.mxu0 0.0
      %889 = vmatpush.msra.mxu0 0.0
      %890 = vmatpush.msra.mxu0 0.0
      %891 = vmatpush.msra.mxu0 0.0
      %892 = vmatpush.msra.mxu0 0.0
      %893 = vmatpush.msra.mxu0 %v306
      %894 = vmatpush.msra.mxu0 %v305
      %895 = vmatpush.msra.mxu0 %v304
      %896 = vmatpush.msra.mxu0 %v303
      %897 = vmatpush.msra.mxu0 %v302
      %898 = vmatpush.msra.mxu0 %v301
      %899 = vmatpush.msra.mxu0 %v300
      %900 = vmatpush.msra.mxu0 %v299
      %901 = vmatmul.f32.gmra.mxu0 %v883
      %v902 = vpop.f32.mrf.mxu0
      %v903 = vadd.f32 0.0, %v902
      %904 = vdwg.mxu0
      %v905 = vmul.f32 %v903, 0.001953125
      %v906 = vperm.slane %v905, 0
      %v907 = vsub.f32 %v865, %v906
      %v908 = vsub.f32 %v866, %v906
      %v909 = vsub.f32 %v867, %v906
      %v910 = vsub.f32 %v868, %v906
      %v911 = vmul.f32 %v907, %v907
      %v912 = vmul.f32 %v908, %v908
      %v913 = vmul.f32 %v909, %v909
      %v914 = vmul.f32 %v910, %v910
      %v915 = vsel %vm408, %v911, 0.0
      %v916 = vsel %vm408, %v912, 0.0
      %v917 = vadd.f32 %v915, %v916
      %v918 = vsel %vm408, %v913, 0.0
      %v919 = vadd.f32 %v917, %v918
      %v920 = vsel %vm408, %v914, 0.0
      %v921 = vadd.f32 %v919, %v920
      %v922 = vrot.slane %v921, 4
      %v923 = vadd.f32 %v921, %v922
      %v924 = vrot.slane %v923, 2
      %v925 = vadd.f32 %v923, %v924
      %v926 = vrot.slane %v925, 1
      %v927 = vadd.f32 %v925, %v926
      %v929 = vsel %vm408, %v927, 0
      %931 = vmatpush.msra.mxu0 0.0
      %932 = vmatpush.msra.mxu0 0.0
      %933 = vmatpush.msra.mxu0 0.0
      %934 = vmatpush.msra.mxu0 0.0
      %935 = vmatpush.msra.mxu0 0.0
      %936 = vmatpush.msra.mxu0 0.0
      %937 = vmatpush.msra.mxu0 0.0
      %938 = vmatpush.msra.mxu0 0.0
      %939 = vmatpush.msra.mxu0 %v306
      %940 = vmatpush.msra.mxu0 %v305
      %941 = vmatpush.msra.mxu0 %v304
      %942 = vmatpush.msra.mxu0 %v303
      %943 = vmatpush.msra.mxu0 %v302
      %944 = vmatpush.msra.mxu0 %v301
      %945 = vmatpush.msra.mxu0 %v300
      %946 = vmatpush.msra.mxu0 %v299
      %947 = vmatmul.f32.gmra.mxu0 %v929
      %v948 = vpop.f32.mrf.mxu0
      %v949 = vadd.f32 0.0, %v948
      %950 = vdwg.mxu0
      %v951 = vmul.f32 %v949, 0.001953125
      %v952 = vadd.f32 %v951, 1e-05
      %v953 = vrsqrt.pop %v952
      %v954 = vmul.f32 %v953, %v952
      %v955 = vmul.f32 %v954, %v953
      %v956 = vmul.f32 0.5, %v955
      %v957 = vsub.f32 1.5, %v956
      %v958 = vmul.f32 %v953, %v957
      %vm959 = vweird.f32 %v952
      %vm960 = vweird.f32 %v953
      %vm961 = vmor %vm959, %vm960
      %v962 = vsel %vm961, %v953, %v958
      %v964 = vrot.slane %v307, 2
      %v966 = vmul.f32 %v962, %v964
      %v967 = vperm.slane %v966, 0
      %v968 = vmul.f32 %v907, %v967
      %v969 = vmul.f32 %v908, %v967
      %v970 = vmul.f32 %v909, %v967
      %v971 = vmul.f32 %v910, %v967
      %v972 = vperm.slane %v307, 3
      %v973 = vadd.f32 %v968, %v972
      %v974 = vadd.f32 %v969, %v972
      %v975 = vadd.f32 %v970, %v972
      %v976 = vadd.f32 %v971, %v972
      %v977 = vadd.f32 %v973, %v287
      %v978 = vadd.f32 %v974, %v288
      %v979 = vadd.f32 %v975, %v289
      %v980 = vadd.f32 %v976, %v290
      %v981 = vmax.f32 %v977, 0.0
      %v982 = vmax.f32 %v978, 0.0
      %v983 = vmax.f32 %v979, 0.0
      %v984 = vmax.f32 %v980, 0.0
      %v985 = vmin.f32 %v981, 20.0
      %v986 = vmin.f32 %v982, 20.0
      %v987 = vmin.f32 %v983, 20.0
      %v988 = vmin.f32 %v984, 20.0
      %989 = vst.msk [vmem:[%s6] sm:$0xff] %vm408, %v985
      %990 = vst.msk [vmem:[%s6 + $0x8] sm:$0xff] %vm408, %v986
      %991 = vst.msk [vmem:[%s6 + $0x10] sm:$0xff] %vm408, %v987
      %992 = vst.msk [vmem:[%s6 + $0x18] sm:$0xff] %vm408, %v988
      // Predicated region
      $region49: #{resnet_forward.1} parent=43 // pred_check
        %p993 = pneg %p171
      $region50: #{resnet_forward.1} parent=43 // pred_check_branch
        %995 = sbr.rel (%p993) target = $region52
      $region51: #{resnet_forward.1} parent=43 // pred_region
        _
      $region52: #{resnet_forward.1} parent=43 // pred_fallthru
        _
      // Predicated region
      $region53: #{resnet_forward.1} parent=43 // pred_check
        %p996 = pneg %p171
      $region54: #{resnet_forward.1} parent=43 // pred_check_branch
        %998 = sbr.rel (%p996) target = $region56
      $region55: #{resnet_forward.1} parent=43 // pred_region
        _
      $region56: #{resnet_forward.1} parent=43 // pred_fallthru
        _
    $region44: #{resnet_forward.1} parent=5 // pred_fallthru
      _
    %p999 = scmp.le.s32.totalorder 2, %s12
    // Predicated region
    $region57: #{resnet_forward.1} parent=5 // pred_check
      %p1000 = pneg %p999
    $region58: #{resnet_forward.1} parent=5 // pred_check_branch
      %1002 = sbr.rel (%p1000) target = $region60
    $region59: #{resnet_forward.1} parent=5 // pred_region
      %s1003 = ssub.s32 %s12, 2
    $region60: #{resnet_forward.1} parent=5 // pred_fallthru
      _
  $region6: #{resnet_forward.1} parent=0 // loop_footer
    %s16 = sadd.s32 1, %s12
  $region7: #{resnet_forward.1} parent=0 // loop_footer_branch
    %11 = sbr.rel target = $region3
  $region8: #{resnet_forward.1} parent=0 // loop_exit
    _

</llo_original>
